<compile_context>
chip_gen: v7x
topology: tpu7x:2x2x1
jax: 0.10.0
libtpu: 0.0.40
codegen_flags: <defaults>
</compile_context>

<pallas_src>
import functools

import numpy as np
import jax
import jax.numpy as jnp
from jax.experimental import pallas as pl
from jax.experimental.pallas import tpu as pltpu


def _round_up(n, m):
    return ((n + m - 1) // m) * m


def _band_bins(L, Fs, high_pass, low_pass, zero_pad):
    """Static pass-band bin selection, shared by kernel basis and reference."""
    pad = int(zero_pad / 2 * L)
    Lp = L + 2 * pad
    F = Lp // 2 + 1
    Fn = Fs / 2.0
    freqs = np.linspace(0.0, Fn, F, dtype=np.float32)   # torch.linspace default f32
    use = np.logical_and(freqs >= high_pass / 60.0, freqs <= low_pass / 60.0)
    sel = np.nonzero(use)[0]
    return sel, pad, Lp


@functools.lru_cache(maxsize=None)
def _band_dft_basis(L, Fs, high_pass, low_pass, zero_pad):
    """Cached band-limited DFT basis with mean-subtraction folded in.

    Packed layout (K <= 64): basis is (L, 128), cos/Lp in cols 0:K and
    -sin/Lp in cols 64:64+K; the kernel combines Re^2+Im^2 with one lane roll.
    Wide layout (K > 64): basis is (L, 2*Kp) with Kp = round_up(K, 128);
    Re in cols 0:K, Im in cols Kp:Kp+K (both halves 128-aligned).
    """
    sel, pad, Lp = _band_bins(L, Fs, high_pass, low_pass, zero_pad)
    K = int(sel.shape[0])
    assert K > 0, "empty pass-band"
    packed = K <= 64
    if packed:
        im_off, w_in, w_out = 64, 128, 128
    else:
        kp = _round_up(K, 128)
        im_off, w_in, w_out = kp, 2 * kp, kp

    n = np.arange(L, dtype=np.float64)[:, None] + pad    # index in padded signal
    k = sel[None, :].astype(np.float64)
    ang = 2.0 * np.pi * n * k / Lp
    basis = np.zeros((L, w_in), dtype=np.float64)
    basis[:, :K] = np.cos(ang) / Lp                      # Re part (forward norm)
    basis[:, im_off:im_off + K] = -np.sin(ang) / Lp      # Im part
    # Fold `x - mean(x)` into the basis:  (x - mean(x) 1) @ B == x @ (B - 1 1^T B / L)
    basis -= basis.mean(axis=0, keepdims=True)
    return jnp.asarray(basis.astype(np.float32)), K, im_off, w_in, w_out, packed


def _norm_psd_kernel(x_ref, basis_ref, o_ref, acc_ref, *, packed, im_off):
    """grid = (batch blocks [parallel], L chunks [arbitrary/reduction])."""
    l = pl.program_id(1)

    @pl.when(l == 0)
    def _init():
        acc_ref[...] = jnp.zeros_like(acc_ref)

    # Band-limited real DFT chunk: one MXU push yields both Re and Im.
    acc_ref[...] += jnp.dot(x_ref[...], basis_ref[...],
                            preferred_element_type=jnp.float32)

    @pl.when(l == pl.num_programs(1) - 1)
    def _finalize():
        z = acc_ref[...]                                  # (Bb, w_in)
        p = z * z                                         # Re^2 / Im^2 (pads are 0)
        s = jnp.sum(p, axis=-1, keepdims=True)            # = sum(Re^2) + sum(Im^2)
        inv = 1.0 / jnp.where(s > 0.0, s, 1.0)            # exact; pad rows -> 0
        if packed:
            # Im^2 sits 64 lanes to the right of Re^2; a 64-lane roll aligns them.
            psd = p + jnp.roll(p, im_off, axis=-1)
        else:
            psd = p[:, :im_off] + p[:, im_off:]            # both 128-aligned slices
        o_ref[...] = psd * inv                             # normalized PSD


def calculate_norm_psd(x, Fs, high_pass, low_pass, zero_pad=0, *,
                       vmem_budget_bytes=32 * 1024 * 1024):
    """Pallas TPU equivalent of CalculateNormPSD.forward, batched over rows."""
    x = jnp.asarray(x, dtype=jnp.float32)
    squeeze = (x.ndim == 1)
    if squeeze:
        x = x[None, :]
    B, L = x.shape

    basis, K, im_off, w_in, w_out, packed = _band_dft_basis(
        int(L), float(Fs), float(high_pass), float(low_pass), int(zero_pad))

    # Batch blocking: balanced blocks; >= 2 blocks when B > 8 so both
    # TensorCores do work on v7x (harmless on single-TC chips).
    if B <= 8:
        nb, block_b = 1, 8
    else:
        nb = max(2, -(-B // 128))
        block_b = _round_up(-(-B // nb), 8)
    B_pad = nb * block_b
    if B_pad != B:
        x = jnp.pad(x, ((0, B_pad - B), (0, 0)))

    # Contraction (L) chunking so the resident basis respects VMEM limits
    # even for long / zero-padded signals.
    l_full = _round_up(L, 8)
    bytes_per_l = 8 * (w_in + block_b)     # two double-buffered f32 streams / row
    if l_full * bytes_per_l <= vmem_budget_bytes:
        tl, nl = l_full, 1
    else:
        tl = max(128, (vmem_budget_bytes // bytes_per_l) // 128 * 128)
        nl = -(-L // tl)
    L_pad = tl * nl
    if L_pad != L:
        x = jnp.pad(x, ((0, 0), (0, L_pad - L)))
        basis = jnp.concatenate(
            [basis, jnp.zeros((L_pad - L, w_in), jnp.float32)], axis=0)

    # Explicit VMEM limit with headroom (double-buffered x & basis tiles,
    # accumulator scratch, double-buffered output tile).
    need = (2 * 4 * tl * w_in + 2 * 4 * block_b * tl
            + 4 * block_b * w_in + 2 * 4 * block_b * w_out)
    vmem_limit = int(min(need + (8 << 20), 64 << 20))

    flops = 2 * B_pad * L_pad * w_in + 6 * B_pad * w_in
    bytes_accessed = 4 * (B_pad * L_pad + nb * L_pad * w_in + B_pad * w_out)

    out = pl.pallas_call(
        functools.partial(_norm_psd_kernel, packed=packed, im_off=im_off),
        out_shape=jax.ShapeDtypeStruct((B_pad, w_out), jnp.float32),
        grid=(nb, nl),
        in_specs=[
            pl.BlockSpec((block_b, tl), lambda i, l: (i, l)),
            pl.BlockSpec((tl, w_in), lambda i, l: (l, 0)),
        ],
        out_specs=pl.BlockSpec((block_b, w_out), lambda i, l: (i, 0)),
        scratch_shapes=[pltpu.VMEM((block_b, w_in), jnp.float32)],
        compiler_params=pltpu.CompilerParams(
            dimension_semantics=("parallel", "arbitrary"),
            vmem_limit_bytes=vmem_limit),
        cost_estimate=pl.CostEstimate(flops=int(flops), transcendentals=int(B_pad),
                                      bytes_accessed=int(bytes_accessed)),
    )(x, basis)

    out = out[:B, :K]
    return out[0] if squeeze else out


@functools.partial(jax.jit,
                   static_argnames=("Fs", "high_pass", "low_pass", "tau", "zero_pad"))
def _fcl_from_batch(x, Fs, high_pass, low_pass, tau, zero_pad):
    """All (2 + N) PSDs in one kernel launch; tiny contrastive tail fused by XLA."""
    psd = calculate_norm_psd(x, Fs, high_pass, low_pass, zero_pad)   # (2+N, K)
    f1, f2, fn = psd[0:1], psd[1:2], psd[2:]
    pos_dis = jnp.exp(jnp.mean((f1 - f2) ** 2) / tau)
    d1 = jnp.mean((fn - f1) ** 2, axis=-1)
    d2 = jnp.mean((fn - f2) ** 2, axis=-1)
    neg_dis_total = jnp.sum(jnp.exp(d1 / tau) + jnp.exp(d2 / tau))
    return jnp.log10(pos_dis / neg_dis_total + 1.0)


def fcl_loss(neg_rppgarr, pos_rppg1, pos_rppg2, *, Fs, high_pass=2.5,
             low_pass=0.4, tau=0.08, zero_pad=0):
    """Pallas-backed equivalent of FCL.forward."""
    negs = jnp.asarray(neg_rppgarr, dtype=jnp.float32)
    if negs.ndim == 1:
        negs = negs[None, :]
    pos1 = jnp.asarray(pos_rppg1, dtype=jnp.float32)[None, :]
    pos2 = jnp.asarray(pos_rppg2, dtype=jnp.float32)[None, :]
    x = jnp.concatenate([pos1, pos2, negs], axis=0)        # (2 + N, L)
    return _fcl_from_batch(x, float(Fs), float(high_pass), float(low_pass),
                           float(tau), int(zero_pad))


# ----------------------- pure-JAX references (for checking) ------------------

def _norm_psd_ref(x, Fs, high_pass, low_pass, zero_pad=0):
    x = jnp.asarray(x, jnp.float32)
    L = x.shape[-1]
    x = x - jnp.mean(x, axis=-1, keepdims=True)
    if zero_pad > 0:
        p = int(zero_pad / 2 * L)
        x = jnp.pad(x, (p, p))
    X = jnp.fft.rfft(x) / x.shape[-1]                      # norm='forward'
    psd = jnp.real(X) ** 2 + jnp.imag(X) ** 2
    sel, _, _ = _band_bins(L, Fs, high_pass, low_pass, zero_pad)
    psd = psd[sel]
    return psd / jnp.sum(psd)


def _fcl_ref(neg_rppgarr, pos_rppg1, pos_rppg2, Fs, high_pass, low_pass, tau,
             zero_pad=0):
    f1 = _norm_psd_ref(pos_rppg1, Fs, high_pass, low_pass, zero_pad)
    f2 = _norm_psd_ref(pos_rppg2, Fs, high_pass, low_pass, zero_pad)
    pos_dis = jnp.exp(jnp.mean((f1 - f2) ** 2) / tau)
    neg_total = 0.0
    for i in range(len(neg_rppgarr)):
        fneg = _norm_psd_ref(neg_rppgarr[i], Fs, high_pass, low_pass, zero_pad)
        neg_total = (neg_total
                     + jnp.exp(jnp.mean((f1 - fneg) ** 2) / tau)
                     + jnp.exp(jnp.mean((f2 - fneg) ** 2) / tau))
    return jnp.log10(pos_dis / neg_total + 1.0)


if __name__ == "__main__":
    # rPPG-style settings: 30 Hz sampling, 40-180 BPM pass-band.
    Fs, high_pass, low_pass, tau = 30.0, 40.0, 180.0, 0.08
    L, n_neg = 128, 4

    key = jax.random.PRNGKey(0)
    k1, k2, k3, k4 = jax.random.split(key, 4)
    pos1 = jax.random.normal(k1, (L,), dtype=jnp.float32)
    pos2 = jax.random.normal(k2, (L,), dtype=jnp.float32)
    negs = jax.random.normal(k3, (n_neg, L), dtype=jnp.float32)
    allsig = jnp.concatenate([pos1[None], pos2[None], negs], axis=0)

    # 1) Batched normalized-PSD kernel (packed Re/Im layout) vs rfft reference.
    psd = jax.block_until_ready(calculate_norm_psd(allsig, Fs, high_pass, low_pass))
    psd_ref = jnp.stack([_norm_psd_ref(allsig[i], Fs, high_pass, low_pass)
                         for i in range(allsig.shape[0])])
    np.testing.assert_allclose(np.asarray(psd), np.asarray(psd_ref),
                               rtol=3e-3, atol=1e-5)

    # 2) Chunked-contraction path (basis tiled along L + accumulator scratch).
    xlong = jax.random.normal(k4, (3, 512), dtype=jnp.float32)
    psd_l = jax.block_until_ready(
        calculate_norm_psd(xlong, Fs, high_pass, low_pass,
                           vmem_budget_bytes=140 * 1024))
    psd_l_ref = jnp.stack([_norm_psd_ref(xlong[i], Fs, high_pass, low_pass)
                           for i in range(3)])
    np.testing.assert_allclose(np.asarray(psd_l), np.asarray(psd_l_ref),
                               rtol=3e-3, atol=1e-5)

    # 3) Wide pass-band (K > 64) exercises the two-half (non-packed) layout.
    xwide = jax.random.normal(k4, (3, 1024), dtype=jnp.float32)
    psd_w = jax.block_until_ready(calculate_norm_psd(xwide, Fs, high_pass, low_pass))
    psd_w_ref = jnp.stack([_norm_psd_ref(xwide[i], Fs, high_pass, low_pass)
                           for i in range(3)])
    np.testing.assert_allclose(np.asarray(psd_w), np.asarray(psd_w_ref),
                               rtol=3e-3, atol=1e-5)

    # 4) Full FCL loss, without and with symmetric zero padding.
    loss = jax.block_until_ready(
        fcl_loss(negs, pos1, pos2, Fs=Fs, high_pass=high_pass,
                 low_pass=low_pass, tau=tau))
    loss_ref = _fcl_ref(negs, pos1, pos2, Fs, high_pass, low_pass, tau)
    np.testing.assert_allclose(np.asarray(loss), np.asarray(loss_ref),
                               rtol=5e-3, atol=1e-6)

    loss_zp = jax.block_until_ready(
        fcl_loss(negs, pos1, pos2, Fs=Fs, high_pass=high_pass,
                 low_pass=low_pass, tau=tau, zero_pad=1))
    loss_zp_ref = _fcl_ref(negs, pos1, pos2, Fs, high_pass, low_pass, tau,
                           zero_pad=1)
    np.testing.assert_allclose(np.asarray(loss_zp), np.asarray(loss_zp_ref),
                               rtol=5e-3, atol=1e-6)

    print("KERNEL_OK")
</pallas_src>

<mosaic_0001>
module attributes {stable_mosaic.version = 11 : i64} {
  func.func @_norm_psd_kernel(%arg0: i32, %arg1: i32, %arg2: memref<8x128xf32, #tpu.memory_space<vmem>>, %arg3: memref<128x128xf32, #tpu.memory_space<vmem>>, %arg4: memref<8x128xf32, #tpu.memory_space<vmem>>, %arg5: memref<8x128xf32, #tpu.memory_space<vmem>>) attributes {dimension_semantics = [#tpu.dimension_semantics<parallel>, #tpu.dimension_semantics<arbitrary>], iteration_bounds = array<i64: 1, 1>, scalar_prefetch = 0 : i64, scratch_operands = 1 : i64, tpu.core_type = #tpu.core_type<tc>, window_params = [{transform_indices = @transform_0, window_bounds = array<i64: 8, 128>}, {transform_indices = @transform_1, window_bounds = array<i64: 128, 128>}, {transform_indices = @transform_2, window_bounds = array<i64: 8, 128>}]} {
    %c0_i32 = arith.constant 0 : i32
    %0 = arith.cmpi eq, %arg1, %c0_i32 : i32
    %1 = arith.extui %0 : i1 to i32
    %c0_i32_0 = arith.constant 0 : i32
    %2 = arith.cmpi ne, %1, %c0_i32_0 : i32
    scf.if %2 {
      %cst_10 = arith.constant 0.000000e+00 : f32
      %12 = vector.broadcast %cst_10 : f32 to vector<8x128xf32>
      %c0_11 = arith.constant 0 : index
      %c0_12 = arith.constant 0 : index
      %13 = vector.load %arg5[%c0_11, %c0_12] : memref<8x128xf32, #tpu.memory_space<vmem>>, vector<8x128xf32>
      tpu.vector_store %arg5[%c0_11, %c0_12], %12 {strides = array<i32>} : memref<8x128xf32, #tpu.memory_space<vmem>>, vector<8x128xf32>,
    } else {
    }
    %c0 = arith.constant 0 : index
    %c0_1 = arith.constant 0 : index
    %3 = vector.load %arg5[%c0, %c0_1] : memref<8x128xf32, #tpu.memory_space<vmem>>, vector<8x128xf32>
    %c0_2 = arith.constant 0 : index
    %c0_3 = arith.constant 0 : index
    %4 = vector.load %arg2[%c0_2, %c0_3] : memref<8x128xf32, #tpu.memory_space<vmem>>, vector<8x128xf32>
    %c0_4 = arith.constant 0 : index
    %c0_5 = arith.constant 0 : index
    %5 = vector.load %arg3[%c0_4, %c0_5] : memref<128x128xf32, #tpu.memory_space<vmem>>, vector<128x128xf32>
    %cst = arith.constant dense<0.000000e+00> : vector<8x128xf32>
    %6 = tpu.matmul %4, %5, %cst {dimension_numbers = #tpu.dot_dimension_numbers<[1], [0], [0], [1], [0, 0, 1, 1], [], []>} : vector<8x128xf32>, vector<128x128xf32>, vector<8x128xf32> -> vector<8x128xf32>
    %7 = arith.addf %3, %6 : vector<8x128xf32>
    %c0_6 = arith.constant 0 : index
    %c0_7 = arith.constant 0 : index
    %8 = vector.load %arg5[%c0_6, %c0_7] : memref<8x128xf32, #tpu.memory_space<vmem>>, vector<8x128xf32>
    tpu.vector_store %arg5[%c0_6, %c0_7], %7 {strides = array<i32>} : memref<8x128xf32, #tpu.memory_space<vmem>>, vector<8x128xf32>,
    %c0_i32_8 = arith.constant 0 : i32
    %9 = arith.cmpi eq, %arg1, %c0_i32_8 : i32
    %10 = arith.extui %9 : i1 to i32
    %c0_i32_9 = arith.constant 0 : i32
    %11 = arith.cmpi ne, %10, %c0_i32_9 : i32
    scf.if %11 {
      %c0_10 = arith.constant 0 : index
      %c0_11 = arith.constant 0 : index
      %12 = vector.load %arg5[%c0_10, %c0_11] : memref<8x128xf32, #tpu.memory_space<vmem>>, vector<8x128xf32>
      %13 = arith.mulf %12, %12 : vector<8x128xf32>
      %cst_12 = arith.constant dense<0.000000e+00> : vector<8xf32>
      %14 = vector.multi_reduction <add>, %13, %cst_12 [1] : vector<8x128xf32> to vector<8xf32>
      %15 = vector.shape_cast %14 : vector<8xf32> to vector<8x1xf32>
      %cst_13 = arith.constant 0.000000e+00 : f32
      %16 = vector.broadcast %cst_13 : f32 to vector<8x1xf32>
      %17 = arith.cmpf ogt, %15, %16 : vector<8x1xf32>
      %cst_14 = arith.constant 1.000000e+00 : f32
      %18 = vector.broadcast %cst_14 : f32 to vector<8x1xf32>
      %19 = arith.select %17, %15, %18 : vector<8x1xi1>, vector<8x1xf32>
      %cst_15 = arith.constant 1.000000e+00 : f32
      %20 = vector.broadcast %cst_15 : f32 to vector<8x1xf32>
      %21 = arith.divf %20, %19 : vector<8x1xf32>
      %22 = vector.extract_strided_slice %13 {offsets = [0, 64], sizes = [8, 64], strides = [1, 1]} : vector<8x128xf32> to vector<8x64xf32>
      %23 = vector.extract_strided_slice %13 {offsets = [0, 0], sizes = [8, 64], strides = [1, 1]} : vector<8x128xf32> to vector<8x64xf32>
      %24 = tpu.concatenate %22, %23 in 1 : vector<8x64xf32>, vector<8x64xf32> -> vector<8x128xf32>
      %25 = arith.addf %13, %24 : vector<8x128xf32>
      %26 = vector.broadcast %21 : vector<8x1xf32> to vector<8x128xf32>
      %27 = arith.mulf %25, %26 : vector<8x128xf32>
      %c0_16 = arith.constant 0 : index
      %c0_17 = arith.constant 0 : index
      %28 = vector.load %arg4[%c0_16, %c0_17] : memref<8x128xf32, #tpu.memory_space<vmem>>, vector<8x128xf32>
      tpu.vector_store %arg4[%c0_16, %c0_17], %27 {strides = array<i32>} : memref<8x128xf32, #tpu.memory_space<vmem>>, vector<8x128xf32>,
    } else {
    }
    return
  }
  func.func @transform_0(%arg0: i32, %arg1: i32) -> (i32, i32) {
    %c0_i32 = arith.constant 0 : i32
    return %arg0, %arg1 : i32, i32
  }
  func.func @transform_1(%arg0: i32, %arg1: i32) -> (i32, i32) {
    %c0_i32 = arith.constant 0 : i32
    %c0_i32_0 = arith.constant 0 : i32
    return %arg1, %c0_i32 : i32, i32
  }
  func.func @transform_2(%arg0: i32, %arg1: i32) -> (i32, i32) {
    %c0_i32 = arith.constant 0 : i32
    %c0_i32_0 = arith.constant 0 : i32
    return %arg0, %c0_i32 : i32, i32
  }
}

</mosaic_0001>

<llo_original>
// kernel: tpu_custom_call.1
$region0: #{tpu_custom_call.1}
  #allocation0 [shape = 'u32[]', space=smem, size = 0x4, offset = 0x4, fixed_abs, tag = 'smem constant byte address 0x4 - core index']
  #allocation1 [shape = 'u32[144,128]{1,0:T(1,128)}', space=vmem, size = 0x12000, scoped, tag = 'internal scratch']
  #allocation2 [shape = 'f32[8,128]{1,0:T(8,128)}', space=vmem, size = 0x1000, scoped, tag = 'scratch operand']
  %s0 = inlined_call_operand.hbm [shape: f32[8,128], index: 0, kind: input, shape index: {}]
  %s1 = inlined_call_operand.hbm [shape: f32[128,128], index: 1, kind: input, shape index: {}]
  %s2 = inlined_call_operand.hbm [shape: f32[8,128], index: 2, kind: output, shape index: {}]
  %s3 = sld [smem:[#allocation0]]
  $region34: #{tpu_custom_call.1} parent=0
    _
  %s5 = ssub.s32 1, %s3
  %s6 = scalar_select 0, %s5, %s3
  $region1: #{tpu_custom_call.1} parent=0
    #allocation3 [shape = 'u8[4096]{0}', space=vmem, size = 0x1000, scoped, tag = 'input window, operand 0, single buffered']
    #allocation4 [shape = 's32[1]{0}', space=sflag, size = 0x4, scoped, tag = 'scoped memory for tpu_custom_call.1']
    #allocation5 [shape = 's32[1]{0}', space=sflag, size = 0x4, scoped, tag = 'scoped memory for tpu_custom_call.1']
    #allocation6 [shape = 'u8[65536]{0}', space=vmem, size = 0x10000, scoped, tag = 'input window, operand 1, single buffered']
    #allocation7 [shape = 's32[1]{0}', space=sflag, size = 0x4, scoped, tag = 'scoped memory for tpu_custom_call.1']
    #allocation8 [shape = 'u8[4096]{0}', space=vmem, size = 0x1000, scoped, tag = 'output window, operand 0, single buffered']
    %7 = vsyncpa [#allocation4], 0
    %8 = vsyncpa [#allocation7], 0
    %9 = vsyncpa [#allocation5], 0
    // Predicated region
    $region2: #{tpu_custom_call.1} parent=1 // pred_check
      _
    $region3: #{tpu_custom_call.1} parent=1 // pred_check_branch
      %11 = sbr.rel (0) target = $region5
    $region4: #{tpu_custom_call.1} parent=1 // pred_region
      %s13 = ssub.s32 128, 128
      %14 = vsyncadd [#allocation4], %s13
      %s16 = sshll.u32 [#allocation3], 4
      %s17 = int_to_ptr.vmem [resolvable:$true] %s16
      %19 = dma.hbm_to_vmem [thread:$0]  %s0, 128, %s17, [#allocation4]
    $region5: #{tpu_custom_call.1} parent=1 // pred_fallthru
      _
    // Predicated region
    $region6: #{tpu_custom_call.1} parent=1 // pred_check
      _
    $region7: #{tpu_custom_call.1} parent=1 // pred_check_branch
      %21 = sbr.rel (0) target = $region9
    $region8: #{tpu_custom_call.1} parent=1 // pred_region
      %s23 = ssub.s32 2048, 2048
      %24 = vsyncadd [#allocation7], %s23
      %s25 = sshll.u32 [#allocation6], 4
      %s26 = int_to_ptr.vmem [resolvable:$true] %s25
      %31 = dma.hbm_to_vmem [thread:$0]  %s1, 2048, %s26, [#allocation7], 128, 128, 8
    $region9: #{tpu_custom_call.1} parent=1 // pred_fallthru
      _
    // Predicated region
    $region10: #{tpu_custom_call.1} parent=1 // pred_check
      _
    $region11: #{tpu_custom_call.1} parent=1 // pred_check_branch
      %33 = sbr.rel (0) target = $region13
    $region12: #{tpu_custom_call.1} parent=1 // pred_region
      %34 = dma.done [#allocation4], 128
    $region13: #{tpu_custom_call.1} parent=1 // pred_fallthru
      _
    // Predicated region
    $region14: #{tpu_custom_call.1} parent=1 // pred_check
      _
    $region15: #{tpu_custom_call.1} parent=1 // pred_check_branch
      %36 = sbr.rel (0) target = $region17
    $region16: #{tpu_custom_call.1} parent=1 // pred_region
      %37 = dma.done [#allocation7], 2048
    $region17: #{tpu_custom_call.1} parent=1 // pred_fallthru
      _
    %p38 = scmp.eq.s32.totalorder 0, 0
    // Predicated region
    $region18: #{tpu_custom_call.1} parent=1 // pred_check
      %p39 = pneg %p38
    $region19: #{tpu_custom_call.1} parent=1 // pred_check_branch
      %41 = sbr.rel (%p39) target = $region21
    $region20: #{tpu_custom_call.1} parent=1 // pred_region
      %42 = vst [vmem:[#allocation2] sm:$0xff] 0.0
    $region21: #{tpu_custom_call.1} parent=1 // pred_fallthru
      _
    %v43 = vld [vmem:[#allocation2] sm:$0xff]
    %v44 = vld [vmem:[#allocation3] sm:$0xff]
    %v45 = vld [vmem:[#allocation6] sm:$0xff]
    %v46 = vld [vmem:[#allocation6 + $0x8] sm:$0xff]
    %v47 = vld [vmem:[#allocation6 + $0x10] sm:$0xff]
    %v48 = vld [vmem:[#allocation6 + $0x18] sm:$0xff]
    %v49 = vld [vmem:[#allocation6 + $0x20] sm:$0xff]
    %v50 = vld [vmem:[#allocation6 + $0x28] sm:$0xff]
    %v51 = vld [vmem:[#allocation6 + $0x30] sm:$0xff]
    %v52 = vld [vmem:[#allocation6 + $0x38] sm:$0xff]
    %v53 = vld [vmem:[#allocation6 + $0x40] sm:$0xff]
    %v54 = vld [vmem:[#allocation6 + $0x48] sm:$0xff]
    %v55 = vld [vmem:[#allocation6 + $0x50] sm:$0xff]
    %v56 = vld [vmem:[#allocation6 + $0x58] sm:$0xff]
    %v57 = vld [vmem:[#allocation6 + $0x60] sm:$0xff]
    %v58 = vld [vmem:[#allocation6 + $0x68] sm:$0xff]
    %v59 = vld [vmem:[#allocation6 + $0x70] sm:$0xff]
    %v60 = vld [vmem:[#allocation6 + $0x78] sm:$0xff]
    %61 = vmatprep.subr.mxu0 0.0
    %62 = vmatpush1.msra.mxu0 %v45
    %63 = vmatprep.subr.mxu0 0.0
    %64 = vmatpush1.msra.mxu0 %v46
    %65 = vmatprep.subr.mxu0 0.0
    %66 = vmatpush1.msra.mxu0 %v47
    %67 = vmatprep.subr.mxu0 0.0
    %68 = vmatpush1.msra.mxu0 %v48
    %69 = vmatprep.subr.mxu0 0.0
    %70 = vmatpush1.msra.mxu0 %v49
    %71 = vmatprep.subr.mxu0 0.0
    %72 = vmatpush1.msra.mxu0 %v50
    %73 = vmatprep.subr.mxu0 0.0
    %74 = vmatpush1.msra.mxu0 %v51
    %75 = vmatprep.subr.mxu0 0.0
    %76 = vmatpush1.msra.mxu0 %v52
    %77 = vmatprep.subr.mxu0 0.0
    %78 = vmatpush1.msra.mxu0 %v53
    %79 = vmatprep.subr.mxu0 0.0
    %80 = vmatpush1.msra.mxu0 %v54
    %81 = vmatprep.subr.mxu0 0.0
    %82 = vmatpush1.msra.mxu0 %v55
    %83 = vmatprep.subr.mxu0 0.0
    %84 = vmatpush1.msra.mxu0 %v56
    %85 = vmatprep.subr.mxu0 0.0
    %86 = vmatpush1.msra.mxu0 %v57
    %87 = vmatprep.subr.mxu0 0.0
    %88 = vmatpush1.msra.mxu0 %v58
    %89 = vmatprep.subr.mxu0 0.0
    %90 = vmatpush1.msra.mxu0 %v59
    %91 = vmatprep.subr.mxu0 0.0
    %92 = vmatpush1.msra.mxu0 %v60
    %93 = vmatprep.subr.mxu0 0.0
    %94 = vmatpush1.msra.mxu0 0.0
    %95 = vmatprep.subr.mxu0 0.0
    %96 = vmatpush1.msra.mxu0 0.0
    %97 = vmatprep.subr.mxu0 0.0
    %98 = vmatpush1.msra.mxu0 0.0
    %99 = vmatprep.subr.mxu0 0.0
    %100 = vmatpush1.msra.mxu0 0.0
    %101 = vmatprep.subr.mxu0 0.0
    %102 = vmatpush1.msra.mxu0 0.0
    %103 = vmatprep.subr.mxu0 0.0
    %104 = vmatpush1.msra.mxu0 0.0
    %105 = vmatprep.subr.mxu0 0.0
    %106 = vmatpush1.msra.mxu0 0.0
    %107 = vmatprep.subr.mxu0 0.0
    %108 = vmatpush1.msra.mxu0 0.0
    %109 = vmatprep.subr.mxu0 0.0
    %110 = vmatpush1.msra.mxu0 0.0
    %111 = vmatprep.subr.mxu0 0.0
    %112 = vmatpush1.msra.mxu0 0.0
    %113 = vmatprep.subr.mxu0 0.0
    %114 = vmatpush1.msra.mxu0 0.0
    %115 = vmatprep.subr.mxu0 0.0
    %116 = vmatpush1.msra.mxu0 0.0
    %117 = vmatprep.subr.mxu0 0.0
    %118 = vmatpush1.msra.mxu0 0.0
    %119 = vmatprep.subr.mxu0 0.0
    %120 = vmatpush1.msra.mxu0 0.0
    %121 = vmatprep.subr.mxu0 0.0
    %122 = vmatpush1.msra.mxu0 0.0
    %123 = vmatprep.subr.mxu0 0.0
    %124 = vmatpush1.msra.mxu0 0.0
    %125 = vmatprep.mubr.f32.mxu0 0.0
    %126 = vmatmul.mubr.f32.gmra.mrb[0].mxu0 %v44
    %v127 = vpop.f32.mrb[0].mxu0
    %v128 = vadd.f32 0.0, %v127
    %v129 = vpop.f32.mrb[0].mxu0
    %130 = vdwg.mxu0
    %v131 = vadd.f32 %v43, %v128
    %132 = vst [vmem:[#allocation2] sm:$0xff] %v131
    // Predicated region
    $region22: #{tpu_custom_call.1} parent=1 // pred_check
      %p133 = pneg %p38
    $region23: #{tpu_custom_call.1} parent=1 // pred_check_branch
      %135 = sbr.rel (%p133) target = $region25
    $region24: #{tpu_custom_call.1} parent=1 // pred_region
      %v136 = vld [vmem:[#allocation2] sm:$0xff]
      %v137 = vmul.f32 %v136, %v136
      %138 = vadd.xlane.f32.xlu0 %v137
      %v139 = vpop.xlane.xlu0 %138
      %vm140 = vcmp.gt.f32.partialorder %v139, 0.0
      %v141 = vsel %vm140, %v139, 1.0
      %v142 = vrcp.pop %v141
      %v143 = vmul.f32 1.0, %v142
      %145 = vrot.lane.b32.xlu0 %v137, 64
      %v146 = vpop.permute.xlu0 %145
      %v148 = vadd.f32 %v137, %v146
      %v149 = vmul.f32 %v148, %v143
      %150 = vst [vmem:[#allocation8] sm:$0xff] %v149
    $region25: #{tpu_custom_call.1} parent=1 // pred_fallthru
      _
    // Predicated region
    $region26: #{tpu_custom_call.1} parent=1 // pred_check
      _
    $region27: #{tpu_custom_call.1} parent=1 // pred_check_branch
      %152 = sbr.rel (0) target = $region29
    $region28: #{tpu_custom_call.1} parent=1 // pred_region
      %s154 = ssub.s32 128, 128
      %155 = vsyncadd [#allocation5], %s154
      %s157 = sshll.u32 [#allocation8], 4
      %s158 = int_to_ptr.vmem [resolvable:$true] %s157
      %160 = dma.vmem_to_hbm [thread:$0]  %s158, 128, %s2, [#allocation5]
    $region29: #{tpu_custom_call.1} parent=1 // pred_fallthru
      _
    // Predicated region
    $region30: #{tpu_custom_call.1} parent=1 // pred_check
      _
    $region31: #{tpu_custom_call.1} parent=1 // pred_check_branch
      %162 = sbr.rel (0) target = $region33
    $region32: #{tpu_custom_call.1} parent=1 // pred_region
      %163 = dma.done [#allocation5], 128
    $region33: #{tpu_custom_call.1} parent=1 // pred_fallthru
      _
    %164 = vsyncpa [#allocation4], 1
    %165 = vsyncpa [#allocation7], 1
    %166 = vsyncpa [#allocation5], 1

</llo_original>
